<compile_context>
chip_gen: v5e
topology: v5e:2x2
jax: 0.10.0
libtpu: 0.0.40
codegen_flags: <defaults>
</compile_context>

<pallas_src>
import functools

import jax
import jax.numpy as jnp
from jax.experimental import pallas as pl
from jax.experimental.pallas import tpu as pltpu


# -----------------------------------------------------------------------------
# Pallas kernel
# -----------------------------------------------------------------------------
def _skip_upsample_kernel(x_ref, w_ref, y_ref, o_ref):
    # x_ref: (1, H, W, Cx)        full low-res image (resident across row tiles)
    # w_ref: (Cx, Cy)             1x1 conv weight (matmul layout)
    # y_ref: (1, TH, 2, W, 2*Cy)  skip tile, viewed as (row, row-parity, col, col-parity*C)
    # o_ref: (1, TH, 2, W, 2*Cy)  output tile, same view
    H, W, Cx = x_ref.shape[1], x_ref.shape[2], x_ref.shape[3]
    Cy = w_ref.shape[1]
    th = o_ref.shape[1]

    t = pl.program_id(1)
    s = pl.multiple_of(t * th, th)          # first low-res row of this tile
    w = w_ref[...]

    def conv_rows(start, n):
        # 1x1 conv of n low-res rows: (n*W, Cx) @ (Cx, Cy) on the MXU, f32 acc.
        xr = x_ref[0, pl.ds(start, n), :, :]
        zr = jnp.dot(xr.reshape(n * W, Cx), w, preferred_element_type=jnp.float32)
        return zr.reshape(n, W, Cy)

    # Convolve at low resolution (commutes with the bilinear upsample).
    z = conv_rows(s, th)                                  # rows s .. s+th-1
    z_top = conv_rows(jnp.maximum(s - 1, 0), 1)           # clamped halo row s-1
    z_bot = conv_rows(jnp.minimum(s + th, H - 1), 1)      # clamped halo row s+th

    z_up = jnp.concatenate([z_top, z[:-1]], axis=0)       # row i-1 (edge-clamped)
    z_dn = jnp.concatenate([z[1:], z_bot], axis=0)        # row i+1 (edge-clamped)

    # Vertical 2x bilinear, align_corners=False: fixed 1/4, 3/4 taps.
    r_even = 0.25 * z_up + 0.75 * z                       # output rows 2i
    r_odd = 0.75 * z + 0.25 * z_dn                        # output rows 2i+1

    def widen(a):
        # Horizontal 2x bilinear; even/odd output columns packed along lanes.
        a_l = jnp.concatenate([a[:, :1], a[:, :-1]], axis=1)    # col j-1 (clamped)
        a_r = jnp.concatenate([a[:, 1:], a[:, -1:]], axis=1)    # col j+1 (clamped)
        c_even = 0.25 * a_l + 0.75 * a
        c_odd = 0.75 * a + 0.25 * a_r
        return jnp.concatenate([c_even, c_odd], axis=-1)        # (th, W, 2*Cy)

    o_ref[0, :, 0, :, :] = (widen(r_even) + y_ref[0, :, 0, :, :]).astype(o_ref.dtype)
    o_ref[0, :, 1, :, :] = (widen(r_odd) + y_ref[0, :, 1, :, :]).astype(o_ref.dtype)


def _pick_block_rows(H, target):
    th = max(1, min(int(target), H))
    while H % th:
        th -= 1
    return th


@functools.partial(jax.jit, static_argnames=("block_rows",))
def skip_upsample(x, y, w, *, block_rows=64):
    """SkipUpSample forward: bilinear 2x upsample -> 1x1 conv (no bias) -> + y.

    x: (B, H, W, Cin+s_factor)  low-res features      (NHWC)
    y: (B, 2H, 2W, Cin)         skip connection       (NHWC)
    w: (Cin+s_factor, Cin)      1x1 conv weight in matmul layout
    """
    B, H, W, Cx = x.shape
    By, H2, W2, Cy = y.shape
    assert (By, H2, W2) == (B, 2 * H, 2 * W), (x.shape, y.shape)
    assert w.shape == (Cx, Cy), (w.shape, Cx, Cy)

    th = _pick_block_rows(H, block_rows)
    nt = H // th

    # Free, contiguous views: (B, 2H, 2W, Cy) == (B, H, 2, W, 2*Cy).
    y_v = y.reshape(B, H, 2, W, 2 * Cy)

    # NOTE: the whole low-res image is kept resident in VMEM per batch element
    # (block index depends only on b) so halo rows are just in-kernel slices.
    # For very large images this block could be replaced by manual halo DMA
    # (pl.ANY + pltpu.make_async_copy); unnecessary at these feature-map sizes.
    out = pl.pallas_call(
        _skip_upsample_kernel,
        out_shape=jax.ShapeDtypeStruct((B, H, 2, W, 2 * Cy), y.dtype),
        grid=(B, nt),
        in_specs=[
            pl.BlockSpec((1, H, W, Cx), lambda b, t: (b, 0, 0, 0)),
            pl.BlockSpec((Cx, Cy), lambda b, t: (0, 0)),
            pl.BlockSpec((1, th, 2, W, 2 * Cy), lambda b, t: (b, t, 0, 0, 0)),
        ],
        out_specs=pl.BlockSpec((1, th, 2, W, 2 * Cy), lambda b, t: (b, t, 0, 0, 0)),
        compiler_params=pltpu.CompilerParams(
            dimension_semantics=("parallel", "parallel")),
    )(x, w, y_v)
    return out.reshape(B, 2 * H, 2 * W, Cy)


# -----------------------------------------------------------------------------
# Pure-JAX reference (mirrors PyTorch Upsample(align_corners=False) + 1x1 conv)
# -----------------------------------------------------------------------------
def _upsample2x_ref(x):
    B, H, W, C = x.shape

    def idx(o, n):
        t = (jnp.arange(o, dtype=jnp.float32) + 0.5) * (n / o) - 0.5
        t = jnp.maximum(t, 0.0)
        lo = jnp.minimum(jnp.floor(t).astype(jnp.int32), n - 1)
        hi = jnp.minimum(lo + 1, n - 1)
        return lo, hi, t - lo.astype(jnp.float32)

    y0, y1, fy = idx(2 * H, H)
    x0, x1, fx = idx(2 * W, W)
    rows = (x[:, y0] * (1.0 - fy)[None, :, None, None]
            + x[:, y1] * fy[None, :, None, None])
    return (rows[:, :, x0] * (1.0 - fx)[None, None, :, None]
            + rows[:, :, x1] * fx[None, None, :, None])


def skip_upsample_ref(x, y, w):
    up = _upsample2x_ref(x)
    B, H2, W2, Cx = up.shape
    z = (up.reshape(-1, Cx) @ w).reshape(B, H2, W2, -1)
    return z + y


# -----------------------------------------------------------------------------
if __name__ == "__main__":
    key = jax.random.PRNGKey(0)
    kx, ky, kw = jax.random.split(key, 3)

    # SkipUpSample(in_channels=8, s_factor=4): x has 12 channels, output has 8.
    B, H, W = 2, 16, 16
    in_channels, s_factor = 8, 4
    Cx, Cy = in_channels + s_factor, in_channels

    x = jax.random.normal(kx, (B, H, W, Cx), jnp.float32)          # low-res features
    y = jax.random.normal(ky, (B, 2 * H, 2 * W, Cy), jnp.float32)  # skip connection
    w = jax.random.normal(kw, (Cx, Cy), jnp.float32) / (Cx ** 0.5)

    out = skip_upsample(x, y, w, block_rows=8)   # grid = (2 batches, 2 row tiles)
    out = jax.block_until_ready(out)

    ref = skip_upsample_ref(x, y, w)
    assert out.shape == (B, 2 * H, 2 * W, Cy)
    assert bool(jnp.all(jnp.isfinite(out)))
    max_err = float(jnp.max(jnp.abs(out - ref)))
    assert max_err < 1e-4, f"mismatch vs reference: {max_err}"
    print("KERNEL_OK")
</pallas_src>

<mosaic_0001>
module attributes {stable_mosaic.version = 11 : i64} {
  func.func @_skip_upsample_kernel(%arg0: i32, %arg1: i32, %arg2: memref<1x16x16x12xf32, #tpu.memory_space<vmem>>, %arg3: memref<12x8xf32, #tpu.memory_space<vmem>>, %arg4: memref<1x8x2x16x16xf32, #tpu.memory_space<vmem>>, %arg5: memref<1x8x2x16x16xf32, #tpu.memory_space<vmem>>) attributes {dimension_semantics = [#tpu.dimension_semantics<parallel>, #tpu.dimension_semantics<parallel>], iteration_bounds = array<i64: 2, 2>, scalar_prefetch = 0 : i64, scratch_operands = 0 : i64, tpu.core_type = #tpu.core_type<tc>, window_params = [{transform_indices = @transform_0, window_bounds = array<i64: 1, 16, 16, 12>}, {pipeline_mode = #tpu.pipeline_mode<synchronous>, transform_indices = @transform_1, window_bounds = array<i64: 12, 8>}, {transform_indices = @transform_2, window_bounds = array<i64: 1, 8, 2, 16, 16>}, {transform_indices = @transform_3, window_bounds = array<i64: 1, 8, 2, 16, 16>}]} {
    %c8_i32 = arith.constant 8 : i32
    %0 = arith.muli %arg1, %c8_i32 : i32
    %1 = tpu.assume_multiple %0, 8 : i32
    %c0 = arith.constant 0 : index
    %c0_0 = arith.constant 0 : index
    %2 = vector.load %arg3[%c0, %c0_0] : memref<12x8xf32, #tpu.memory_space<vmem>>, vector<12x8xf32>
    %c0_1 = arith.constant 0 : index
    %3 = arith.index_cast %1 : i32 to index
    %c0_2 = arith.constant 0 : index
    %c0_3 = arith.constant 0 : index
    %4 = vector.load %arg2[%c0_1, %3, %c0_2, %c0_3] : memref<1x16x16x12xf32, #tpu.memory_space<vmem>>, vector<1x8x16x12xf32>
    %5 = vector.shape_cast %4 : vector<1x8x16x12xf32> to vector<8x16x12xf32>
    %6 = vector.shape_cast %5 : vector<8x16x12xf32> to vector<128x12xf32>
    %cst = arith.constant dense<0.000000e+00> : vector<128x8xf32>
    %7 = tpu.matmul %6, %2, %cst {dimension_numbers = #tpu.dot_dimension_numbers<[1], [0], [0], [1], [0, 0, 1, 1], [], []>} : vector<128x12xf32>, vector<12x8xf32>, vector<128x8xf32> -> vector<128x8xf32>
    %8 = vector.shape_cast %7 : vector<128x8xf32> to vector<8x16x8xf32>
    %c1_i32 = arith.constant 1 : i32
    %9 = arith.subi %1, %c1_i32 : i32
    %c0_i32 = arith.constant 0 : i32
    %10 = arith.maxsi %9, %c0_i32 : i32
    %c0_4 = arith.constant 0 : index
    %11 = arith.index_cast %10 : i32 to index
    %c0_5 = arith.constant 0 : index
    %c0_6 = arith.constant 0 : index
    %12 = vector.load %arg2[%c0_4, %11, %c0_5, %c0_6] : memref<1x16x16x12xf32, #tpu.memory_space<vmem>>, vector<1x1x16x12xf32>
    %13 = vector.shape_cast %12 : vector<1x1x16x12xf32> to vector<1x16x12xf32>
    %14 = vector.shape_cast %13 : vector<1x16x12xf32> to vector<16x12xf32>
    %cst_7 = arith.constant dense<0.000000e+00> : vector<16x8xf32>
    %15 = tpu.matmul %14, %2, %cst_7 {dimension_numbers = #tpu.dot_dimension_numbers<[1], [0], [0], [1], [0, 0, 1, 1], [], []>} : vector<16x12xf32>, vector<12x8xf32>, vector<16x8xf32> -> vector<16x8xf32>
    %16 = vector.shape_cast %15 : vector<16x8xf32> to vector<1x16x8xf32>
    %c8_i32_8 = arith.constant 8 : i32
    %17 = arith.addi %1, %c8_i32_8 : i32
    %c15_i32 = arith.constant 15 : i32
    %18 = arith.minsi %17, %c15_i32 : i32
    %c0_9 = arith.constant 0 : index
    %19 = arith.index_cast %18 : i32 to index
    %c0_10 = arith.constant 0 : index
    %c0_11 = arith.constant 0 : index
    %20 = vector.load %arg2[%c0_9, %19, %c0_10, %c0_11] : memref<1x16x16x12xf32, #tpu.memory_space<vmem>>, vector<1x1x16x12xf32>
    %21 = vector.shape_cast %20 : vector<1x1x16x12xf32> to vector<1x16x12xf32>
    %22 = vector.shape_cast %21 : vector<1x16x12xf32> to vector<16x12xf32>
    %cst_12 = arith.constant dense<0.000000e+00> : vector<16x8xf32>
    %23 = tpu.matmul %22, %2, %cst_12 {dimension_numbers = #tpu.dot_dimension_numbers<[1], [0], [0], [1], [0, 0, 1, 1], [], []>} : vector<16x12xf32>, vector<12x8xf32>, vector<16x8xf32> -> vector<16x8xf32>
    %24 = vector.shape_cast %23 : vector<16x8xf32> to vector<1x16x8xf32>
    %25 = vector.extract_strided_slice %8 {offsets = [0, 0, 0], sizes = [7, 16, 8], strides = [1, 1, 1]} : vector<8x16x8xf32> to vector<7x16x8xf32>
    %26 = tpu.concatenate %16, %25 in 0 : vector<1x16x8xf32>, vector<7x16x8xf32> -> vector<8x16x8xf32>
    %27 = vector.extract_strided_slice %8 {offsets = [1, 0, 0], sizes = [7, 16, 8], strides = [1, 1, 1]} : vector<8x16x8xf32> to vector<7x16x8xf32>
    %28 = tpu.concatenate %27, %24 in 0 : vector<7x16x8xf32>, vector<1x16x8xf32> -> vector<8x16x8xf32>
    %cst_13 = arith.constant 2.500000e-01 : f32
    %29 = vector.broadcast %cst_13 : f32 to vector<8x16x8xf32>
    %30 = arith.mulf %29, %26 : vector<8x16x8xf32>
    %cst_14 = arith.constant 7.500000e-01 : f32
    %31 = vector.broadcast %cst_14 : f32 to vector<8x16x8xf32>
    %32 = arith.mulf %31, %8 : vector<8x16x8xf32>
    %33 = arith.addf %30, %32 : vector<8x16x8xf32>
    %cst_15 = arith.constant 7.500000e-01 : f32
    %34 = vector.broadcast %cst_15 : f32 to vector<8x16x8xf32>
    %35 = arith.mulf %34, %8 : vector<8x16x8xf32>
    %cst_16 = arith.constant 2.500000e-01 : f32
    %36 = vector.broadcast %cst_16 : f32 to vector<8x16x8xf32>
    %37 = arith.mulf %36, %28 : vector<8x16x8xf32>
    %38 = arith.addf %35, %37 : vector<8x16x8xf32>
    %39 = vector.extract_strided_slice %33 {offsets = [0, 0, 0], sizes = [8, 1, 8], strides = [1, 1, 1]} : vector<8x16x8xf32> to vector<8x1x8xf32>
    %40 = vector.extract_strided_slice %33 {offsets = [0, 0, 0], sizes = [8, 15, 8], strides = [1, 1, 1]} : vector<8x16x8xf32> to vector<8x15x8xf32>
    %41 = tpu.concatenate %39, %40 in 1 : vector<8x1x8xf32>, vector<8x15x8xf32> -> vector<8x16x8xf32>
    %42 = vector.extract_strided_slice %33 {offsets = [0, 1, 0], sizes = [8, 15, 8], strides = [1, 1, 1]} : vector<8x16x8xf32> to vector<8x15x8xf32>
    %43 = vector.extract_strided_slice %33 {offsets = [0, 15, 0], sizes = [8, 1, 8], strides = [1, 1, 1]} : vector<8x16x8xf32> to vector<8x1x8xf32>
    %44 = tpu.concatenate %42, %43 in 1 : vector<8x15x8xf32>, vector<8x1x8xf32> -> vector<8x16x8xf32>
    %cst_17 = arith.constant 2.500000e-01 : f32
    %45 = vector.broadcast %cst_17 : f32 to vector<8x16x8xf32>
    %46 = arith.mulf %45, %41 : vector<8x16x8xf32>
    %cst_18 = arith.constant 7.500000e-01 : f32
    %47 = vector.broadcast %cst_18 : f32 to vector<8x16x8xf32>
    %48 = arith.mulf %47, %33 : vector<8x16x8xf32>
    %49 = arith.addf %46, %48 : vector<8x16x8xf32>
    %cst_19 = arith.constant 7.500000e-01 : f32
    %50 = vector.broadcast %cst_19 : f32 to vector<8x16x8xf32>
    %51 = arith.mulf %50, %33 : vector<8x16x8xf32>
    %cst_20 = arith.constant 2.500000e-01 : f32
    %52 = vector.broadcast %cst_20 : f32 to vector<8x16x8xf32>
    %53 = arith.mulf %52, %44 : vector<8x16x8xf32>
    %54 = arith.addf %51, %53 : vector<8x16x8xf32>
    %55 = tpu.concatenate %49, %54 in 2 : vector<8x16x8xf32>, vector<8x16x8xf32> -> vector<8x16x16xf32>
    %c0_21 = arith.constant 0 : index
    %c0_22 = arith.constant 0 : index
    %c0_23 = arith.constant 0 : index
    %c0_24 = arith.constant 0 : index
    %c0_25 = arith.constant 0 : index
    %56 = vector.load %arg4[%c0_21, %c0_22, %c0_23, %c0_24, %c0_25] : memref<1x8x2x16x16xf32, #tpu.memory_space<vmem>>, vector<1x8x1x16x16xf32>
    %57 = vector.shape_cast %56 : vector<1x8x1x16x16xf32> to vector<8x16x16xf32>
    %58 = arith.addf %55, %57 : vector<8x16x16xf32>
    %c0_26 = arith.constant 0 : index
    %c0_27 = arith.constant 0 : index
    %c0_28 = arith.constant 0 : index
    %c0_29 = arith.constant 0 : index
    %c0_30 = arith.constant 0 : index
    %59 = vector.load %arg5[%c0_26, %c0_27, %c0_28, %c0_29, %c0_30] : memref<1x8x2x16x16xf32, #tpu.memory_space<vmem>>, vector<1x8x1x16x16xf32>
    %60 = vector.shape_cast %59 : vector<1x8x1x16x16xf32> to vector<8x16x16xf32>
    %61 = vector.shape_cast %58 : vector<8x16x16xf32> to vector<1x8x1x16x16xf32>
    tpu.vector_store %arg5[%c0_26, %c0_27, %c0_28, %c0_29, %c0_30], %61 {strides = array<i32>} : memref<1x8x2x16x16xf32, #tpu.memory_space<vmem>>, vector<1x8x1x16x16xf32>,
    %62 = vector.extract_strided_slice %38 {offsets = [0, 0, 0], sizes = [8, 1, 8], strides = [1, 1, 1]} : vector<8x16x8xf32> to vector<8x1x8xf32>
    %63 = vector.extract_strided_slice %38 {offsets = [0, 0, 0], sizes = [8, 15, 8], strides = [1, 1, 1]} : vector<8x16x8xf32> to vector<8x15x8xf32>
    %64 = tpu.concatenate %62, %63 in 1 : vector<8x1x8xf32>, vector<8x15x8xf32> -> vector<8x16x8xf32>
    %65 = vector.extract_strided_slice %38 {offsets = [0, 1, 0], sizes = [8, 15, 8], strides = [1, 1, 1]} : vector<8x16x8xf32> to vector<8x15x8xf32>
    %66 = vector.extract_strided_slice %38 {offsets = [0, 15, 0], sizes = [8, 1, 8], strides = [1, 1, 1]} : vector<8x16x8xf32> to vector<8x1x8xf32>
    %67 = tpu.concatenate %65, %66 in 1 : vector<8x15x8xf32>, vector<8x1x8xf32> -> vector<8x16x8xf32>
    %cst_31 = arith.constant 2.500000e-01 : f32
    %68 = vector.broadcast %cst_31 : f32 to vector<8x16x8xf32>
    %69 = arith.mulf %68, %64 : vector<8x16x8xf32>
    %cst_32 = arith.constant 7.500000e-01 : f32
    %70 = vector.broadcast %cst_32 : f32 to vector<8x16x8xf32>
    %71 = arith.mulf %70, %38 : vector<8x16x8xf32>
    %72 = arith.addf %69, %71 : vector<8x16x8xf32>
    %cst_33 = arith.constant 7.500000e-01 : f32
    %73 = vector.broadcast %cst_33 : f32 to vector<8x16x8xf32>
    %74 = arith.mulf %73, %38 : vector<8x16x8xf32>
    %cst_34 = arith.constant 2.500000e-01 : f32
    %75 = vector.broadcast %cst_34 : f32 to vector<8x16x8xf32>
    %76 = arith.mulf %75, %67 : vector<8x16x8xf32>
    %77 = arith.addf %74, %76 : vector<8x16x8xf32>
    %78 = tpu.concatenate %72, %77 in 2 : vector<8x16x8xf32>, vector<8x16x8xf32> -> vector<8x16x16xf32>
    %c0_35 = arith.constant 0 : index
    %c0_36 = arith.constant 0 : index
    %c1 = arith.constant 1 : index
    %c0_37 = arith.constant 0 : index
    %c0_38 = arith.constant 0 : index
    %79 = vector.load %arg4[%c0_35, %c0_36, %c1, %c0_37, %c0_38] : memref<1x8x2x16x16xf32, #tpu.memory_space<vmem>>, vector<1x8x1x16x16xf32>
    %80 = vector.shape_cast %79 : vector<1x8x1x16x16xf32> to vector<8x16x16xf32>
    %81 = arith.addf %78, %80 : vector<8x16x16xf32>
    %c0_39 = arith.constant 0 : index
    %c0_40 = arith.constant 0 : index
    %c1_41 = arith.constant 1 : index
    %c0_42 = arith.constant 0 : index
    %c0_43 = arith.constant 0 : index
    %82 = vector.load %arg5[%c0_39, %c0_40, %c1_41, %c0_42, %c0_43] : memref<1x8x2x16x16xf32, #tpu.memory_space<vmem>>, vector<1x8x1x16x16xf32>
    %83 = vector.shape_cast %82 : vector<1x8x1x16x16xf32> to vector<8x16x16xf32>
    %84 = vector.shape_cast %81 : vector<8x16x16xf32> to vector<1x8x1x16x16xf32>
    tpu.vector_store %arg5[%c0_39, %c0_40, %c1_41, %c0_42, %c0_43], %84 {strides = array<i32>} : memref<1x8x2x16x16xf32, #tpu.memory_space<vmem>>, vector<1x8x1x16x16xf32>,
    return
  }
  func.func @transform_0(%arg0: i32, %arg1: i32) -> (i32, i32, i32, i32) {
    %c0_i32 = arith.constant 0 : i32
    %c0_i32_0 = arith.constant 0 : i32
    %c0_i32_1 = arith.constant 0 : i32
    %c0_i32_2 = arith.constant 0 : i32
    return %arg0, %c0_i32, %c0_i32_0, %c0_i32_1 : i32, i32, i32, i32
  }
  func.func @transform_1(%arg0: i32, %arg1: i32) -> (i32, i32) {
    %c0_i32 = arith.constant 0 : i32
    %c0_i32_0 = arith.constant 0 : i32
    %c0_i32_1 = arith.constant 0 : i32
    return %c0_i32, %c0_i32_0 : i32, i32
  }
  func.func @transform_2(%arg0: i32, %arg1: i32) -> (i32, i32, i32, i32, i32) {
    %c0_i32 = arith.constant 0 : i32
    %c0_i32_0 = arith.constant 0 : i32
    %c0_i32_1 = arith.constant 0 : i32
    %c0_i32_2 = arith.constant 0 : i32
    return %arg0, %arg1, %c0_i32, %c0_i32_0, %c0_i32_1 : i32, i32, i32, i32, i32
  }
  func.func @transform_3(%arg0: i32, %arg1: i32) -> (i32, i32, i32, i32, i32) {
    %c0_i32 = arith.constant 0 : i32
    %c0_i32_0 = arith.constant 0 : i32
    %c0_i32_1 = arith.constant 0 : i32
    %c0_i32_2 = arith.constant 0 : i32
    return %arg0, %arg1, %c0_i32, %c0_i32_0, %c0_i32_1 : i32, i32, i32, i32, i32
  }
}

</mosaic_0001>

<llo_original>
// kernel: skip_upsample.1
$region0: #{skip_upsample.1}
  #allocation0 [shape = 'u32[]', space=smem, size = 0x4, offset = 0x4, fixed_abs, tag = 'smem constant byte address 0x4 - core index']
  #allocation1 [shape = 'u32[72,128]{1,0:T(1,128)}', space=vmem, size = 0x9000, scoped, tag = 'internal scratch']
  %s0 = inlined_call_operand.vmem [shape: f32[2,16,16,12], index: 0, kind: input, shape index: {}]
  %s1 = inlined_call_operand.vmem [shape: f32[12,8], index: 1, kind: input, shape index: {}]
  %s2 = inlined_call_operand.vmem [shape: f32[2,16,2,16,16], index: 2, kind: input, shape index: {}]
  %s3 = inlined_call_operand.vmem [shape: f32[2,16,2,16,16], index: 3, kind: output, shape index: {}]
  %s4 = sld [smem:[#allocation0]]
  $region45: #{skip_upsample.1} parent=0
    _
  %s6 = ssub.s32 1, %s4
  %s7 = scalar_select 0, %s6, %s4
  loop: start=0, step=1, limit=6
  $region2: #{skip_upsample.1} parent=0 // loop_pre_header
    _
  $region3: #{skip_upsample.1} parent=0 // loop_header
    %s9 = sphi 0, %s13
    %p10 = scmp.ge.s32.totalorder %s9, 6
    %s16 = sphi 0, %s28
    %s17 = sphi 0, %s24
    %s18 = sphi 0, %s16
    %s19 = sphi 0, %s17
    %s20 = sphi 0, %s18
    %s21 = sphi 0, %s19
    %s31 = sphi 0, %s33
    %s34 = sphi 0, %s31
    %s35 = sphi 0, %s34
    %s51 = sphi 0, %s35
    %s55 = sphi 0, %s55
    %s57 = sphi 0, %s55
    %s58 = sphi 0, %s57
    %s72 = sphi 0, %s58
    %s80 = sphi 0, %s82
    %s83 = sphi 0, %s80
    %s84 = sphi 0, %s83
    %s100 = sphi 0, %s84
    %s108 = sphi 0, %s110
    %s111 = sphi 0, %s108
    %s112 = sphi 0, %s111
    %s128 = sphi 0, %s112
  $region4: #{skip_upsample.1} parent=0 // loop_header_branch
    %12 = sbr.rel (%p10) target = $region8
  $region5: #{skip_upsample.1} parent=0 // loop_body
    %s14 = ssub.s32 %s9, 1
    %s15 = ssub.s32 %s9, 2
    %s22 = sadd.s32 1, %s17
    %p23 = scmp.ge.s32.totalorder %s22, 2
    %s24 = scalar_select %p23, 0, %s22
    %s25 = sadd.s32 1, %s16
    %s26 = scalar_select %p23, %s25, %s16
    %p27 = scmp.ge.s32.totalorder %s26, 2
    %s28 = scalar_select %p27, 0, %s26
    %s29 = ssub.s32 %s16, %s28
    %p30 = scmp.eq.s32.totalorder %s29, 0
    %s32 = sadd.s32 %s31, 1
    %s33 = scalar_select %p30, %s31, %s32
    %p36 = pneg %p30
    %p37 = scmp.eq.s32.totalorder %s9, 3
    %p38 = por %p36, %p37
    %p39 = scmp.ne.s32.totalorder %s31, %s34
    %p40 = scmp.eq.s32.totalorder %s9, 0
    %p41 = por %p39, %p40
    %p42 = scmp.ne.s32.totalorder %s31, %s34
    %p43 = scmp.eq.s32.totalorder %s14, 3
    %p44 = por %p42, %p43
    %p45 = scmp.ne.s32.totalorder %s34, %s35
    %p46 = scmp.eq.s32.totalorder %s14, 0
    %p47 = por %p45, %p46
    %p48 = scmp.ne.s32.totalorder %s34, %s35
    %p49 = scmp.eq.s32.totalorder %s15, 3
    %p50 = por %p48, %p49
    %p52 = scmp.ne.s32.totalorder %s35, %s51
    %p53 = scmp.eq.s32.totalorder %s15, 0
    %p54 = por %p52, %p53
    %s56 = sadd.s32 %s55, 1
    %p59 = scmp.eq.s32.totalorder %s9, 3
    %p60 = scmp.ne.s32.totalorder %s55, %s57
    %p61 = scmp.eq.s32.totalorder %s9, 0
    %p62 = por %p60, %p61
    %p63 = scmp.ne.s32.totalorder %s55, %s57
    %p64 = scmp.eq.s32.totalorder %s14, 3
    %p65 = por %p63, %p64
    %p66 = scmp.ne.s32.totalorder %s57, %s58
    %p67 = scmp.eq.s32.totalorder %s14, 0
    %p68 = por %p66, %p67
    %p69 = scmp.ne.s32.totalorder %s57, %s58
    %p70 = scmp.eq.s32.totalorder %s15, 3
    %p71 = por %p69, %p70
    %p73 = scmp.ne.s32.totalorder %s58, %s72
    %p74 = scmp.eq.s32.totalorder %s15, 0
    %p75 = por %p73, %p74
    %s76 = ssub.s32 %s16, %s28
    %s77 = ssub.s32 %s17, %s24
    %s78 = sor.u32 %s76, %s77
    %p79 = scmp.eq.s32.totalorder %s78, 0
    %s81 = sadd.s32 %s80, 1
    %s82 = scalar_select %p79, %s80, %s81
    %p85 = pneg %p79
    %p86 = scmp.eq.s32.totalorder %s9, 3
    %p87 = por %p85, %p86
    %p88 = scmp.ne.s32.totalorder %s80, %s83
    %p89 = scmp.eq.s32.totalorder %s9, 0
    %p90 = por %p88, %p89
    %p91 = scmp.ne.s32.totalorder %s80, %s83
    %p92 = scmp.eq.s32.totalorder %s14, 3
    %p93 = por %p91, %p92
    %p94 = scmp.ne.s32.totalorder %s83, %s84
    %p95 = scmp.eq.s32.totalorder %s14, 0
    %p96 = por %p94, %p95
    %p97 = scmp.ne.s32.totalorder %s83, %s84
    %p98 = scmp.eq.s32.totalorder %s15, 3
    %p99 = por %p97, %p98
    %p101 = scmp.ne.s32.totalorder %s84, %s100
    %p102 = scmp.eq.s32.totalorder %s15, 0
    %p103 = por %p101, %p102
    %s104 = ssub.s32 %s16, %s28
    %s105 = ssub.s32 %s17, %s24
    %s106 = sor.u32 %s104, %s105
    %p107 = scmp.eq.s32.totalorder %s106, 0
    %s109 = sadd.s32 %s108, 1
    %s110 = scalar_select %p107, %s108, %s109
    %p113 = pneg %p107
    %p114 = scmp.eq.s32.totalorder %s9, 3
    %p115 = por %p113, %p114
    %p116 = scmp.ne.s32.totalorder %s108, %s111
    %p117 = scmp.eq.s32.totalorder %s9, 0
    %p118 = por %p116, %p117
    %p119 = scmp.ne.s32.totalorder %s108, %s111
    %p120 = scmp.eq.s32.totalorder %s14, 3
    %p121 = por %p119, %p120
    %p122 = scmp.ne.s32.totalorder %s111, %s112
    %p123 = scmp.eq.s32.totalorder %s14, 0
    %p124 = por %p122, %p123
    %p125 = scmp.ne.s32.totalorder %s111, %s112
    %p126 = scmp.eq.s32.totalorder %s15, 3
    %p127 = por %p125, %p126
    %p129 = scmp.ne.s32.totalorder %s112, %s128
    %p130 = scmp.eq.s32.totalorder %s15, 0
    %p131 = por %p129, %p130
    %p132 = scmp.le.s32.totalorder 1, %s9
    %p133 = scmp.lt.s32.totalorder %s9, 5
    %p134 = pnand %p132, %p133
    %p135 = pneg %p134
    // Predicated region
    $region9: #{skip_upsample.1} parent=5 // pred_check
      _
    $region10: #{skip_upsample.1} parent=5 // pred_check_branch
      %137 = sbr.rel (%p134) target = $region12
    $region11: #{skip_upsample.1} parent=5 // pred_region
      %s138 = ssub.s32 %s9, 1
      // Predicated region
      $region13: #{skip_upsample.1} parent=11 // pred_check
        %p139 = pneg %p68
      $region14: #{skip_upsample.1} parent=11 // pred_check_branch
        %141 = sbr.rel (%p139) target = $region16
      $region15: #{skip_upsample.1} parent=11 // pred_region
        _
      $region16: #{skip_upsample.1} parent=11 // pred_fallthru
        _
    $region12: #{skip_upsample.1} parent=5 // pred_fallthru
      _
    %p142 = scmp.lt.s32.totalorder %s9, 4
    // Predicated region
    $region17: #{skip_upsample.1} parent=5 // pred_check
      %p143 = pneg %p142
    $region18: #{skip_upsample.1} parent=5 // pred_check_branch
      %145 = sbr.rel (%p143) target = $region20
    $region19: #{skip_upsample.1} parent=5 // pred_region
      // Predicated region
      $region21: #{skip_upsample.1} parent=19 // pred_check
        %p146 = pneg %p41
      $region22: #{skip_upsample.1} parent=19 // pred_check_branch
        %148 = sbr.rel (%p146) target = $region24
      $region23: #{skip_upsample.1} parent=19 // pred_region
        %p149 = scmp.lt.s32.totalorder %s16, 1
        %s150 = scalar_select %p149, %s16, 1
        %s151 = smul.addr %s150, 32
        %s152 = smul.addr %s151, 8
        %s153 = scalar_lea.vmem %s0, %s152
      $region24: #{skip_upsample.1} parent=19 // pred_fallthru
        _
      // Predicated region
      $region25: #{skip_upsample.1} parent=19 // pred_check
        %p154 = pneg %p90
      $region26: #{skip_upsample.1} parent=19 // pred_check_branch
        %156 = sbr.rel (%p154) target = $region28
      $region27: #{skip_upsample.1} parent=19 // pred_region
        %s157 = smul.u32 8, %s17
        %p158 = scmp.lt.s32.totalorder %s16, 1
        %s159 = scalar_select %p158, %s16, 1
        %p160 = scmp.lt.s32.totalorder %s157, 15
        %s161 = scalar_select %p160, %s157, 15
        %s162 = smul.addr %s161, 4
        %s163 = smul.addr %s159, 64
        %s164 = sadd.s32 %s162, %s163
        %s165 = smul.addr %s164, 8
        %s166 = scalar_lea.vmem %s2, %s165
        %s167 = smul.u32 8, %s17
      $region28: #{skip_upsample.1} parent=19 // pred_fallthru
        _
    $region20: #{skip_upsample.1} parent=5 // pred_fallthru
      _
    %p168 = scmp.le.s32.totalorder 1, %s9
    %p169 = scmp.lt.s32.totalorder %s9, 5
    %p170 = pnand %p168, %p169
    %p171 = pneg %p170
    // Predicated region
    $region29: #{skip_upsample.1} parent=5 // pred_check
      _
    $region30: #{skip_upsample.1} parent=5 // pred_check_branch
      %173 = sbr.rel (%p170) target = $region32
    $region31: #{skip_upsample.1} parent=5 // pred_region
      %s174 = ssub.s32 %s9, 1
      %p175 = scmp.lt.s32.totalorder %s18, 1
      %s176 = scalar_select %p175, %s18, 1
      %s177 = smul.addr %s176, 32
      %s178 = smul.addr %s177, 8
      %s179 = scalar_lea.vmem %s0, %s178
      %p180 = pneg %p47
      %p181 = pneg %p44
      %p182 = pneg %p68
      %p183 = pneg %p65
      %s184 = smul.u32 8, %s19
      %p185 = scmp.lt.s32.totalorder %s18, 1
      %s186 = scalar_select %p185, %s18, 1
      %p187 = scmp.lt.s32.totalorder %s184, 15
      %s188 = scalar_select %p187, %s184, 15
      %s189 = smul.addr %s188, 4
      %s190 = smul.addr %s186, 64
      %s191 = sadd.s32 %s189, %s190
      %s192 = smul.addr %s191, 8
      %s193 = scalar_lea.vmem %s2, %s192
      %p194 = pneg %p96
      %p195 = pneg %p93
      %p196 = pneg %p124
      %p197 = pneg %p121
      %s198 = smul.u32 8, %s19
      %p199 = scmp.lt.s32.totalorder %s18, 1
      %s200 = scalar_select %p199, %s18, 1
      %p201 = scmp.lt.s32.totalorder %s198, 15
      %s202 = scalar_select %p201, %s198, 15
      %s203 = smul.addr %s202, 4
      %s204 = smul.addr %s200, 64
      %s205 = sadd.s32 %s203, %s204
      %s206 = smul.addr %s205, 8
      %s207 = scalar_lea.vmem %s3, %s206
      %p208 = scmp.lt.s32.totalorder %s18, 1
      %s209 = scalar_select %p208, %s18, 1
      %s210 = smul.addr %s209, 32
      %s211 = smul.addr %s210, 8
      %s212 = scalar_lea.vmem %s0, %s211
      %s213 = smul.u32 8, %s19
      %p214 = scmp.lt.s32.totalorder %s18, 1
      %s215 = scalar_select %p214, %s18, 1
      %p216 = scmp.lt.s32.totalorder %s213, 15
      %s217 = scalar_select %p216, %s213, 15
      %s218 = smul.addr %s217, 4
      %s219 = smul.addr %s215, 64
      %s220 = sadd.s32 %s218, %s219
      %s221 = smul.addr %s220, 8
      %s222 = scalar_lea.vmem %s2, %s221
      %s223 = smul.u32 8, %s19
      %s224 = smul.u32 8, %s19
      %p225 = scmp.lt.s32.totalorder %s18, 1
      %s226 = scalar_select %p225, %s18, 1
      %p227 = scmp.lt.s32.totalorder %s224, 15
      %s228 = scalar_select %p227, %s224, 15
      %s229 = smul.addr %s228, 4
      %s230 = smul.addr %s226, 64
      %s231 = sadd.s32 %s229, %s230
      %s232 = smul.addr %s231, 8
      %s233 = scalar_lea.vmem %s3, %s232
      %s234 = smul.u32 8, %s19
      %s235 = smul.u32 %s19, 8
      %v236 = vld [vmem:[%s1] sm:$0xff]
      %v237 = vld [vmem:[%s1 + $0x8] sm:$0xf]
      %s238 = smul.u32 %s235, 16
      %s239 = scalar_lea.vmem %s212, %s238
      %v240 = vld [vmem:[%s239] sm:$0xff]
      %v241 = vld [vmem:[%s239 + $0x8] sm:$0xff]
      %v242 = vld [vmem:[%s239 + $0x10] sm:$0xff]
      %v243 = vld [vmem:[%s239 + $0x18] sm:$0xff]
      %v244 = vld [vmem:[%s239 + $0x20] sm:$0xff]
      %v245 = vld [vmem:[%s239 + $0x28] sm:$0xff]
      %v246 = vld [vmem:[%s239 + $0x30] sm:$0xff]
      %v247 = vld [vmem:[%s239 + $0x38] sm:$0xff]
      %v248 = vld [vmem:[%s239 + $0x40] sm:$0xff]
      %v249 = vld [vmem:[%s239 + $0x48] sm:$0xff]
      %v250 = vld [vmem:[%s239 + $0x50] sm:$0xff]
      %v251 = vld [vmem:[%s239 + $0x58] sm:$0xff]
      %v252 = vld [vmem:[%s239 + $0x60] sm:$0xff]
      %v253 = vld [vmem:[%s239 + $0x68] sm:$0xff]
      %v254 = vld [vmem:[%s239 + $0x70] sm:$0xff]
      %v255 = vld [vmem:[%s239 + $0x78] sm:$0xff]
      %vm256 = vcmask 97280
      %v258 = vsel %vm256, %v240, 0
      %v261 = vsel %vm256, %v241, 0
      %v264 = vsel %vm256, %v242, 0
      %v267 = vsel %vm256, %v243, 0
      %v270 = vsel %vm256, %v244, 0
      %v273 = vsel %vm256, %v245, 0
      %v276 = vsel %vm256, %v246, 0
      %v279 = vsel %vm256, %v247, 0
      %v282 = vsel %vm256, %v248, 0
      %v285 = vsel %vm256, %v249, 0
      %v288 = vsel %vm256, %v250, 0
      %v291 = vsel %vm256, %v251, 0
      %v294 = vsel %vm256, %v252, 0
      %v297 = vsel %vm256, %v253, 0
      %v300 = vsel %vm256, %v254, 0
      %v303 = vsel %vm256, %v255, 0
      %vm305 = vcmask 1043456
      %v307 = vsel %vm305, %v237, 0
      %309 = vmatpush.msra.mxu0 0.0
      %310 = vmatpush.msra.mxu0 0.0
      %311 = vmatpush.msra.mxu0 0.0
      %312 = vmatpush.msra.mxu0 0.0
      %313 = vmatpush.msra.mxu0 0.0
      %314 = vmatpush.msra.mxu0 0.0
      %315 = vmatpush.msra.mxu0 0.0
      %316 = vmatpush.msra.mxu0 0.0
      %317 = vmatpush.msra.mxu0 0.0
      %318 = vmatpush.msra.mxu0 0.0
      %319 = vmatpush.msra.mxu0 0.0
      %320 = vmatpush.msra.mxu0 0.0
      %321 = vmatpush.msra.mxu0 0.0
      %322 = vmatpush.msra.mxu0 0.0
      %323 = vmatpush.msra.mxu0 %v307
      %324 = vmatpush.msra.mxu0 %v236
      %325 = vmatmul.f32.gmra.mxu0 %v258
      %v326 = vpop.f32.mrf.mxu0
      %v327 = vadd.f32 0.0, %v326
      %328 = vmatmul.f32.gmra.mxu0 %v261
      %v329 = vpop.f32.mrf.mxu0
      %v330 = vadd.f32 0.0, %v329
      %331 = vmatmul.f32.gmra.mxu0 %v264
      %v332 = vpop.f32.mrf.mxu0
      %v333 = vadd.f32 0.0, %v332
      %334 = vmatmul.f32.gmra.mxu0 %v267
      %v335 = vpop.f32.mrf.mxu0
      %v336 = vadd.f32 0.0, %v335
      %337 = vmatmul.f32.gmra.mxu0 %v270
      %v338 = vpop.f32.mrf.mxu0
      %v339 = vadd.f32 0.0, %v338
      %340 = vmatmul.f32.gmra.mxu0 %v273
      %v341 = vpop.f32.mrf.mxu0
      %v342 = vadd.f32 0.0, %v341
      %343 = vmatmul.f32.gmra.mxu0 %v276
      %v344 = vpop.f32.mrf.mxu0
      %v345 = vadd.f32 0.0, %v344
      %346 = vmatmul.f32.gmra.mxu0 %v279
      %v347 = vpop.f32.mrf.mxu0
      %v348 = vadd.f32 0.0, %v347
      %349 = vmatmul.f32.gmra.mxu0 %v282
      %v350 = vpop.f32.mrf.mxu0
      %v351 = vadd.f32 0.0, %v350
      %352 = vmatmul.f32.gmra.mxu0 %v285
      %v353 = vpop.f32.mrf.mxu0
      %v354 = vadd.f32 0.0, %v353
      %355 = vmatmul.f32.gmra.mxu0 %v288
      %v356 = vpop.f32.mrf.mxu0
      %v357 = vadd.f32 0.0, %v356
      %358 = vmatmul.f32.gmra.mxu0 %v291
      %v359 = vpop.f32.mrf.mxu0
      %v360 = vadd.f32 0.0, %v359
      %361 = vmatmul.f32.gmra.mxu0 %v294
      %v362 = vpop.f32.mrf.mxu0
      %v363 = vadd.f32 0.0, %v362
      %364 = vmatmul.f32.gmra.mxu0 %v297
      %v365 = vpop.f32.mrf.mxu0
      %v366 = vadd.f32 0.0, %v365
      %367 = vmatmul.f32.gmra.mxu0 %v300
      %v368 = vpop.f32.mrf.mxu0
      %v369 = vadd.f32 0.0, %v368
      %370 = vmatmul.f32.gmra.mxu0 %v303
      %v371 = vpop.f32.mrf.mxu0
      %v372 = vadd.f32 0.0, %v371
      %373 = vdwg.mxu0
      %s374 = ssub.s32 %s235, 1
      %p375 = scmp.gt.s32.totalorder %s374, 0
      %s376 = scalar_select %p375, %s374, 0
      %s377 = smul.u32 %s376, 16
      %s378 = scalar_lea.vmem %s212, %s377
      %v379 = vld [vmem:[%s378] sm:$0xff]
      %v380 = vld [vmem:[%s378 + $0x8] sm:$0xff]
      %v382 = vsel %vm256, %v379, 0
      %v385 = vsel %vm256, %v380, 0
      %387 = vmatpush.msra.mxu0 0.0
      %388 = vmatpush.msra.mxu0 0.0
      %389 = vmatpush.msra.mxu0 0.0
      %390 = vmatpush.msra.mxu0 0.0
      %391 = vmatpush.msra.mxu0 0.0
      %392 = vmatpush.msra.mxu0 0.0
      %393 = vmatpush.msra.mxu0 0.0
      %394 = vmatpush.msra.mxu0 0.0
      %395 = vmatpush.msra.mxu0 0.0
      %396 = vmatpush.msra.mxu0 0.0
      %397 = vmatpush.msra.mxu0 0.0
      %398 = vmatpush.msra.mxu0 0.0
      %399 = vmatpush.msra.mxu0 0.0
      %400 = vmatpush.msra.mxu0 0.0
      %401 = vmatpush.msra.mxu0 %v307
      %402 = vmatpush.msra.mxu0 %v236
      %403 = vmatmul.f32.gmra.mxu0 %v382
      %v404 = vpop.f32.mrf.mxu0
      %v405 = vadd.f32 0.0, %v404
      %406 = vmatmul.f32.gmra.mxu0 %v385
      %v407 = vpop.f32.mrf.mxu0
      %v408 = vadd.f32 0.0, %v407
      %409 = vdwg.mxu0
      %s410 = sadd.s32 %s235, 8
      %p411 = scmp.lt.s32.totalorder %s410, 15
      %s412 = scalar_select %p411, %s410, 15
      %s413 = smul.u32 %s412, 16
      %s414 = scalar_lea.vmem %s212, %s413
      %v415 = vld [vmem:[%s414] sm:$0xff]
      %v416 = vld [vmem:[%s414 + $0x8] sm:$0xff]
      %v418 = vsel %vm256, %v415, 0
      %v421 = vsel %vm256, %v416, 0
      %423 = vmatpush.msra.mxu0 0.0
      %424 = vmatpush.msra.mxu0 0.0
      %425 = vmatpush.msra.mxu0 0.0
      %426 = vmatpush.msra.mxu0 0.0
      %427 = vmatpush.msra.mxu0 0.0
      %428 = vmatpush.msra.mxu0 0.0
      %429 = vmatpush.msra.mxu0 0.0
      %430 = vmatpush.msra.mxu0 0.0
      %431 = vmatpush.msra.mxu0 0.0
      %432 = vmatpush.msra.mxu0 0.0
      %433 = vmatpush.msra.mxu0 0.0
      %434 = vmatpush.msra.mxu0 0.0
      %435 = vmatpush.msra.mxu0 0.0
      %436 = vmatpush.msra.mxu0 0.0
      %437 = vmatpush.msra.mxu0 %v307
      %438 = vmatpush.msra.mxu0 %v236
      %439 = vmatmul.f32.gmra.mxu0 %v418
      %v440 = vpop.f32.mrf.mxu0
      %v441 = vadd.f32 0.0, %v440
      %442 = vmatmul.f32.gmra.mxu0 %v421
      %v443 = vpop.f32.mrf.mxu0
      %v444 = vadd.f32 0.0, %v443
      %445 = vdwg.mxu0
      %v446 = vmul.f32 %v405, 0.25
      %v447 = vmul.f32 %v408, 0.25
      %v448 = vmul.f32 %v327, 0.25
      %v449 = vmul.f32 %v330, 0.25
      %v450 = vmul.f32 %v333, 0.25
      %v451 = vmul.f32 %v336, 0.25
      %v452 = vmul.f32 %v339, 0.25
      %v453 = vmul.f32 %v342, 0.25
      %v454 = vmul.f32 %v345, 0.25
      %v455 = vmul.f32 %v348, 0.25
      %v456 = vmul.f32 %v351, 0.25
      %v457 = vmul.f32 %v354, 0.25
      %v458 = vmul.f32 %v357, 0.25
      %v459 = vmul.f32 %v360, 0.25
      %v460 = vmul.f32 %v363, 0.25
      %v461 = vmul.f32 %v366, 0.25
      %v462 = vmul.f32 %v327, 0.75
      %v463 = vmul.f32 %v330, 0.75
      %v464 = vmul.f32 %v333, 0.75
      %v465 = vmul.f32 %v336, 0.75
      %v466 = vmul.f32 %v339, 0.75
      %v467 = vmul.f32 %v342, 0.75
      %v468 = vmul.f32 %v345, 0.75
      %v469 = vmul.f32 %v348, 0.75
      %v470 = vmul.f32 %v351, 0.75
      %v471 = vmul.f32 %v354, 0.75
      %v472 = vmul.f32 %v357, 0.75
      %v473 = vmul.f32 %v360, 0.75
      %v474 = vmul.f32 %v363, 0.75
      %v475 = vmul.f32 %v366, 0.75
      %v476 = vmul.f32 %v369, 0.75
      %v477 = vmul.f32 %v372, 0.75
      %v478 = vadd.f32 %v446, %v462
      %v479 = vadd.f32 %v447, %v463
      %v480 = vadd.f32 %v448, %v464
      %v481 = vadd.f32 %v449, %v465
      %v482 = vadd.f32 %v450, %v466
      %v483 = vadd.f32 %v451, %v467
      %v484 = vadd.f32 %v452, %v468
      %v485 = vadd.f32 %v453, %v469
      %v486 = vadd.f32 %v454, %v470
      %v487 = vadd.f32 %v455, %v471
      %v488 = vadd.f32 %v456, %v472
      %v489 = vadd.f32 %v457, %v473
      %v490 = vadd.f32 %v458, %v474
      %v491 = vadd.f32 %v459, %v475
      %v492 = vadd.f32 %v460, %v476
      %v493 = vadd.f32 %v461, %v477
      %v494 = vmul.f32 %v369, 0.25
      %v495 = vmul.f32 %v372, 0.25
      %v496 = vmul.f32 %v441, 0.25
      %v497 = vmul.f32 %v444, 0.25
      %v498 = vadd.f32 %v462, %v450
      %v499 = vadd.f32 %v463, %v451
      %v500 = vadd.f32 %v464, %v452
      %v501 = vadd.f32 %v465, %v453
      %v502 = vadd.f32 %v466, %v454
      %v503 = vadd.f32 %v467, %v455
      %v504 = vadd.f32 %v468, %v456
      %v505 = vadd.f32 %v469, %v457
      %v506 = vadd.f32 %v470, %v458
      %v507 = vadd.f32 %v471, %v459
      %v508 = vadd.f32 %v472, %v460
      %v509 = vadd.f32 %v473, %v461
      %v510 = vadd.f32 %v474, %v494
      %v511 = vadd.f32 %v475, %v495
      %v512 = vadd.f32 %v476, %v496
      %v513 = vadd.f32 %v477, %v497
      %vm530 = vcmask 1040384
      %v531 = vrot.slane %v478, 7
      %v532 = vrot.slane %v479, 7
      %v533 = vsel %vm530, %v531, %v532
      %v534 = vrot.slane %v480, 7
      %v535 = vrot.slane %v481, 7
      %v536 = vsel %vm530, %v534, %v535
      %v537 = vrot.slane %v482, 7
      %v538 = vrot.slane %v483, 7
      %v539 = vsel %vm530, %v537, %v538
      %v540 = vrot.slane %v484, 7
      %v541 = vrot.slane %v485, 7
      %v542 = vsel %vm530, %v540, %v541
      %v543 = vrot.slane %v486, 7
      %v544 = vrot.slane %v487, 7
      %v545 = vsel %vm530, %v543, %v544
      %v546 = vrot.slane %v488, 7
      %v547 = vrot.slane %v489, 7
      %v548 = vsel %vm530, %v546, %v547
      %v549 = vrot.slane %v490, 7
      %v550 = vrot.slane %v491, 7
      %v551 = vsel %vm530, %v549, %v550
      %v552 = vrot.slane %v492, 7
      %v553 = vrot.slane %v493, 7
      %v554 = vsel %vm530, %v552, %v553
      %v571 = vsel %vm530, %v478, %v531
      %v572 = vsel %vm530, %v480, %v534
      %v573 = vsel %vm530, %v482, %v537
      %v574 = vsel %vm530, %v484, %v540
      %v575 = vsel %vm530, %v486, %v543
      %v576 = vsel %vm530, %v488, %v546
      %v577 = vsel %vm530, %v490, %v549
      %v578 = vsel %vm530, %v492, %v552
      %vm579 = vcmask 1046528
      %v580 = vrot.slane %v478, 1
      %v581 = vrot.slane %v479, 1
      %v582 = vsel %vm579, %v580, %v581
      %v583 = vrot.slane %v480, 1
      %v584 = vrot.slane %v481, 1
      %v585 = vsel %vm579, %v583, %v584
      %v586 = vrot.slane %v482, 1
      %v587 = vrot.slane %v483, 1
      %v588 = vsel %vm579, %v586, %v587
      %v589 = vrot.slane %v484, 1
      %v590 = vrot.slane %v485, 1
      %v591 = vsel %vm579, %v589, %v590
      %v592 = vrot.slane %v486, 1
      %v593 = vrot.slane %v487, 1
      %v594 = vsel %vm579, %v592, %v593
      %v595 = vrot.slane %v488, 1
      %v596 = vrot.slane %v489, 1
      %v597 = vsel %vm579, %v595, %v596
      %v598 = vrot.slane %v490, 1
      %v599 = vrot.slane %v491, 1
      %v600 = vsel %vm579, %v598, %v599
      %v601 = vrot.slane %v492, 1
      %v602 = vrot.slane %v493, 1
      %v603 = vsel %vm579, %v601, %v602
      %v620 = vsel %vm579, %v581, %v479
      %v621 = vsel %vm579, %v584, %v481
      %v622 = vsel %vm579, %v587, %v483
      %v623 = vsel %vm579, %v590, %v485
      %v624 = vsel %vm579, %v593, %v487
      %v625 = vsel %vm579, %v596, %v489
      %v626 = vsel %vm579, %v599, %v491
      %v627 = vsel %vm579, %v602, %v493
      %v628 = vmul.f32 %v571, 0.25
      %v629 = vmul.f32 %v533, 0.25
      %v630 = vmul.f32 %v572, 0.25
      %v631 = vmul.f32 %v536, 0.25
      %v632 = vmul.f32 %v573, 0.25
      %v633 = vmul.f32 %v539, 0.25
      %v634 = vmul.f32 %v574, 0.25
      %v635 = vmul.f32 %v542, 0.25
      %v636 = vmul.f32 %v575, 0.25
      %v637 = vmul.f32 %v545, 0.25
      %v638 = vmul.f32 %v576, 0.25
      %v639 = vmul.f32 %v548, 0.25
      %v640 = vmul.f32 %v577, 0.25
      %v641 = vmul.f32 %v551, 0.25
      %v642 = vmul.f32 %v578, 0.25
      %v643 = vmul.f32 %v554, 0.25
      %v644 = vmul.f32 %v478, 0.75
      %v645 = vmul.f32 %v479, 0.75
      %v646 = vmul.f32 %v480, 0.75
      %v647 = vmul.f32 %v481, 0.75
      %v648 = vmul.f32 %v482, 0.75
      %v649 = vmul.f32 %v483, 0.75
      %v650 = vmul.f32 %v484, 0.75
      %v651 = vmul.f32 %v485, 0.75
      %v652 = vmul.f32 %v486, 0.75
      %v653 = vmul.f32 %v487, 0.75
      %v654 = vmul.f32 %v488, 0.75
      %v655 = vmul.f32 %v489, 0.75
      %v656 = vmul.f32 %v490, 0.75
      %v657 = vmul.f32 %v491, 0.75
      %v658 = vmul.f32 %v492, 0.75
      %v659 = vmul.f32 %v493, 0.75
      %v660 = vadd.f32 %v628, %v644
      %v661 = vadd.f32 %v629, %v645
      %v662 = vadd.f32 %v630, %v646
      %v663 = vadd.f32 %v631, %v647
      %v664 = vadd.f32 %v632, %v648
      %v665 = vadd.f32 %v633, %v649
      %v666 = vadd.f32 %v634, %v650
      %v667 = vadd.f32 %v635, %v651
      %v668 = vadd.f32 %v636, %v652
      %v669 = vadd.f32 %v637, %v653
      %v670 = vadd.f32 %v638, %v654
      %v671 = vadd.f32 %v639, %v655
      %v672 = vadd.f32 %v640, %v656
      %v673 = vadd.f32 %v641, %v657
      %v674 = vadd.f32 %v642, %v658
      %v675 = vadd.f32 %v643, %v659
      %v676 = vmul.f32 %v582, 0.25
      %v677 = vmul.f32 %v620, 0.25
      %v678 = vmul.f32 %v585, 0.25
      %v679 = vmul.f32 %v621, 0.25
      %v680 = vmul.f32 %v588, 0.25
      %v681 = vmul.f32 %v622, 0.25
      %v682 = vmul.f32 %v591, 0.25
      %v683 = vmul.f32 %v623, 0.25
      %v684 = vmul.f32 %v594, 0.25
      %v685 = vmul.f32 %v624, 0.25
      %v686 = vmul.f32 %v597, 0.25
      %v687 = vmul.f32 %v625, 0.25
      %v688 = vmul.f32 %v600, 0.25
      %v689 = vmul.f32 %v626, 0.25
      %v690 = vmul.f32 %v603, 0.25
      %v691 = vmul.f32 %v627, 0.25
      %v692 = vadd.f32 %v644, %v676
      %v693 = vadd.f32 %v645, %v677
      %v694 = vadd.f32 %v646, %v678
      %v695 = vadd.f32 %v647, %v679
      %v696 = vadd.f32 %v648, %v680
      %v697 = vadd.f32 %v649, %v681
      %v698 = vadd.f32 %v650, %v682
      %v699 = vadd.f32 %v651, %v683
      %v700 = vadd.f32 %v652, %v684
      %v701 = vadd.f32 %v653, %v685
      %v702 = vadd.f32 %v654, %v686
      %v703 = vadd.f32 %v655, %v687
      %v704 = vadd.f32 %v656, %v688
      %v705 = vadd.f32 %v657, %v689
      %v706 = vadd.f32 %v658, %v690
      %v707 = vadd.f32 %v659, %v691
      %724 = vrot.lane.b32.xlu0 %v692, 8
      %v725 = vpop.permute.xlu0 %724
      %726 = vrot.lane.b32.xlu0 %v693, 8
      %v727 = vpop.permute.xlu0 %726
      %728 = vrot.lane.b32.xlu0 %v694, 8
      %v729 = vpop.permute.xlu0 %728
      %730 = vrot.lane.b32.xlu0 %v695, 8
      %v731 = vpop.permute.xlu0 %730
      %732 = vrot.lane.b32.xlu0 %v696, 8
      %v733 = vpop.permute.xlu0 %732
      %734 = vrot.lane.b32.xlu0 %v697, 8
      %v735 = vpop.permute.xlu0 %734
      %736 = vrot.lane.b32.xlu0 %v698, 8
      %v737 = vpop.permute.xlu0 %736
      %738 = vrot.lane.b32.xlu0 %v699, 8
      %v739 = vpop.permute.xlu0 %738
      %740 = vrot.lane.b32.xlu0 %v700, 8
      %v741 = vpop.permute.xlu0 %740
      %742 = vrot.lane.b32.xlu0 %v701, 8
      %v743 = vpop.permute.xlu0 %742
      %744 = vrot.lane.b32.xlu0 %v702, 8
      %v745 = vpop.permute.xlu0 %744
      %746 = vrot.lane.b32.xlu0 %v703, 8
      %v747 = vpop.permute.xlu0 %746
      %748 = vrot.lane.b32.xlu0 %v704, 8
      %v749 = vpop.permute.xlu0 %748
      %750 = vrot.lane.b32.xlu0 %v705, 8
      %v751 = vpop.permute.xlu0 %750
      %752 = vrot.lane.b32.xlu0 %v706, 8
      %v753 = vpop.permute.xlu0 %752
      %754 = vrot.lane.b32.xlu0 %v707, 8
      %v755 = vpop.permute.xlu0 %754
      %vm772 = vcmask 64512
      %v773 = vsel %vm772, %v660, %v725
      %v774 = vsel %vm772, %v661, %v727
      %v775 = vsel %vm772, %v662, %v729
      %v776 = vsel %vm772, %v663, %v731
      %v777 = vsel %vm772, %v664, %v733
      %v778 = vsel %vm772, %v665, %v735
      %v779 = vsel %vm772, %v666, %v737
      %v780 = vsel %vm772, %v667, %v739
      %v781 = vsel %vm772, %v668, %v741
      %v782 = vsel %vm772, %v669, %v743
      %v783 = vsel %vm772, %v670, %v745
      %v784 = vsel %vm772, %v671, %v747
      %v785 = vsel %vm772, %v672, %v749
      %v786 = vsel %vm772, %v673, %v751
      %v787 = vsel %vm772, %v674, %v753
      %v788 = vsel %vm772, %v675, %v755
      %v789 = vld [vmem:[%s222] sm:$0xff]
      %v790 = vld [vmem:[%s222 + $0x8] sm:$0xff]
      %v791 = vld [vmem:[%s222 + $0x20] sm:$0xff]
      %v792 = vld [vmem:[%s222 + $0x28] sm:$0xff]
      %v793 = vld [vmem:[%s222 + $0x40] sm:$0xff]
      %v794 = vld [vmem:[%s222 + $0x48] sm:$0xff]
      %v795 = vld [vmem:[%s222 + $0x60] sm:$0xff]
      %v796 = vld [vmem:[%s222 + $0x68] sm:$0xff]
      %v797 = vld [vmem:[%s222 + $0x80] sm:$0xff]
      %v798 = vld [vmem:[%s222 + $0x88] sm:$0xff]
      %v799 = vld [vmem:[%s222 + $0xa0] sm:$0xff]
      %v800 = vld [vmem:[%s222 + $0xa8] sm:$0xff]
      %v801 = vld [vmem:[%s222 + $0xc0] sm:$0xff]
      %v802 = vld [vmem:[%s222 + $0xc8] sm:$0xff]
      %v803 = vld [vmem:[%s222 + $0xe0] sm:$0xff]
      %v804 = vld [vmem:[%s222 + $0xe8] sm:$0xff]
      %v805 = vadd.f32 %v773, %v789
      %v806 = vadd.f32 %v774, %v790
      %v807 = vadd.f32 %v775, %v791
      %v808 = vadd.f32 %v776, %v792
      %v809 = vadd.f32 %v777, %v793
      %v810 = vadd.f32 %v778, %v794
      %v811 = vadd.f32 %v779, %v795
      %v812 = vadd.f32 %v780, %v796
      %v813 = vadd.f32 %v781, %v797
      %v814 = vadd.f32 %v782, %v798
      %v815 = vadd.f32 %v783, %v799
      %v816 = vadd.f32 %v784, %v800
      %v817 = vadd.f32 %v785, %v801
      %v818 = vadd.f32 %v786, %v802
      %v819 = vadd.f32 %v787, %v803
      %v820 = vadd.f32 %v788, %v804
      %vm821 = vcmask 130048
      %822 = vst.msk [vmem:[%s233] sm:$0xff] %vm821, %v805
      %823 = vst.msk [vmem:[%s233 + $0x8] sm:$0xff] %vm821, %v806
      %824 = vst.msk [vmem:[%s233 + $0x20] sm:$0xff] %vm821, %v807
      %825 = vst.msk [vmem:[%s233 + $0x28] sm:$0xff] %vm821, %v808
      %826 = vst.msk [vmem:[%s233 + $0x40] sm:$0xff] %vm821, %v809
      %827 = vst.msk [vmem:[%s233 + $0x48] sm:$0xff] %vm821, %v810
      %828 = vst.msk [vmem:[%s233 + $0x60] sm:$0xff] %vm821, %v811
      %829 = vst.msk [vmem:[%s233 + $0x68] sm:$0xff] %vm821, %v812
      %830 = vst.msk [vmem:[%s233 + $0x80] sm:$0xff] %vm821, %v813
      %831 = vst.msk [vmem:[%s233 + $0x88] sm:$0xff] %vm821, %v814
      %832 = vst.msk [vmem:[%s233 + $0xa0] sm:$0xff] %vm821, %v815
      %833 = vst.msk [vmem:[%s233 + $0xa8] sm:$0xff] %vm821, %v816
      %834 = vst.msk [vmem:[%s233 + $0xc0] sm:$0xff] %vm821, %v817
      %835 = vst.msk [vmem:[%s233 + $0xc8] sm:$0xff] %vm821, %v818
      %836 = vst.msk [vmem:[%s233 + $0xe0] sm:$0xff] %vm821, %v819
      %837 = vst.msk [vmem:[%s233 + $0xe8] sm:$0xff] %vm821, %v820
      %v854 = vrot.slane %v498, 7
      %v855 = vrot.slane %v499, 7
      %v856 = vsel %vm530, %v854, %v855
      %v857 = vrot.slane %v500, 7
      %v858 = vrot.slane %v501, 7
      %v859 = vsel %vm530, %v857, %v858
      %v860 = vrot.slane %v502, 7
      %v861 = vrot.slane %v503, 7
      %v862 = vsel %vm530, %v860, %v861
      %v863 = vrot.slane %v504, 7
      %v864 = vrot.slane %v505, 7
      %v865 = vsel %vm530, %v863, %v864
      %v866 = vrot.slane %v506, 7
      %v867 = vrot.slane %v507, 7
      %v868 = vsel %vm530, %v866, %v867
      %v869 = vrot.slane %v508, 7
      %v870 = vrot.slane %v509, 7
      %v871 = vsel %vm530, %v869, %v870
      %v872 = vrot.slane %v510, 7
      %v873 = vrot.slane %v511, 7
      %v874 = vsel %vm530, %v872, %v873
      %v875 = vrot.slane %v512, 7
      %v876 = vrot.slane %v513, 7
      %v877 = vsel %vm530, %v875, %v876
      %v894 = vsel %vm530, %v498, %v854
      %v895 = vsel %vm530, %v500, %v857
      %v896 = vsel %vm530, %v502, %v860
      %v897 = vsel %vm530, %v504, %v863
      %v898 = vsel %vm530, %v506, %v866
      %v899 = vsel %vm530, %v508, %v869
      %v900 = vsel %vm530, %v510, %v872
      %v901 = vsel %vm530, %v512, %v875
      %v902 = vrot.slane %v498, 1
      %v903 = vrot.slane %v499, 1
      %v904 = vsel %vm579, %v902, %v903
      %v905 = vrot.slane %v500, 1
      %v906 = vrot.slane %v501, 1
      %v907 = vsel %vm579, %v905, %v906
      %v908 = vrot.slane %v502, 1
      %v909 = vrot.slane %v503, 1
      %v910 = vsel %vm579, %v908, %v909
      %v911 = vrot.slane %v504, 1
      %v912 = vrot.slane %v505, 1
      %v913 = vsel %vm579, %v911, %v912
      %v914 = vrot.slane %v506, 1
      %v915 = vrot.slane %v507, 1
      %v916 = vsel %vm579, %v914, %v915
      %v917 = vrot.slane %v508, 1
      %v918 = vrot.slane %v509, 1
      %v919 = vsel %vm579, %v917, %v918
      %v920 = vrot.slane %v510, 1
      %v921 = vrot.slane %v511, 1
      %v922 = vsel %vm579, %v920, %v921
      %v923 = vrot.slane %v512, 1
      %v924 = vrot.slane %v513, 1
      %v925 = vsel %vm579, %v923, %v924
      %v942 = vsel %vm579, %v903, %v499
      %v943 = vsel %vm579, %v906, %v501
      %v944 = vsel %vm579, %v909, %v503
      %v945 = vsel %vm579, %v912, %v505
      %v946 = vsel %vm579, %v915, %v507
      %v947 = vsel %vm579, %v918, %v509
      %v948 = vsel %vm579, %v921, %v511
      %v949 = vsel %vm579, %v924, %v513
      %v950 = vmul.f32 %v894, 0.25
      %v951 = vmul.f32 %v856, 0.25
      %v952 = vmul.f32 %v895, 0.25
      %v953 = vmul.f32 %v859, 0.25
      %v954 = vmul.f32 %v896, 0.25
      %v955 = vmul.f32 %v862, 0.25
      %v956 = vmul.f32 %v897, 0.25
      %v957 = vmul.f32 %v865, 0.25
      %v958 = vmul.f32 %v898, 0.25
      %v959 = vmul.f32 %v868, 0.25
      %v960 = vmul.f32 %v899, 0.25
      %v961 = vmul.f32 %v871, 0.25
      %v962 = vmul.f32 %v900, 0.25
      %v963 = vmul.f32 %v874, 0.25
      %v964 = vmul.f32 %v901, 0.25
      %v965 = vmul.f32 %v877, 0.25
      %v966 = vmul.f32 %v498, 0.75
      %v967 = vmul.f32 %v499, 0.75
      %v968 = vmul.f32 %v500, 0.75
      %v969 = vmul.f32 %v501, 0.75
      %v970 = vmul.f32 %v502, 0.75
      %v971 = vmul.f32 %v503, 0.75
      %v972 = vmul.f32 %v504, 0.75
      %v973 = vmul.f32 %v505, 0.75
      %v974 = vmul.f32 %v506, 0.75
      %v975 = vmul.f32 %v507, 0.75
      %v976 = vmul.f32 %v508, 0.75
      %v977 = vmul.f32 %v509, 0.75
      %v978 = vmul.f32 %v510, 0.75
      %v979 = vmul.f32 %v511, 0.75
      %v980 = vmul.f32 %v512, 0.75
      %v981 = vmul.f32 %v513, 0.75
      %v982 = vadd.f32 %v950, %v966
      %v983 = vadd.f32 %v951, %v967
      %v984 = vadd.f32 %v952, %v968
      %v985 = vadd.f32 %v953, %v969
      %v986 = vadd.f32 %v954, %v970
      %v987 = vadd.f32 %v955, %v971
      %v988 = vadd.f32 %v956, %v972
      %v989 = vadd.f32 %v957, %v973
      %v990 = vadd.f32 %v958, %v974
      %v991 = vadd.f32 %v959, %v975
      %v992 = vadd.f32 %v960, %v976
      %v993 = vadd.f32 %v961, %v977
      %v994 = vadd.f32 %v962, %v978
      %v995 = vadd.f32 %v963, %v979
      %v996 = vadd.f32 %v964, %v980
      %v997 = vadd.f32 %v965, %v981
      %v998 = vmul.f32 %v904, 0.25
      %v999 = vmul.f32 %v942, 0.25
      %v1000 = vmul.f32 %v907, 0.25
      %v1001 = vmul.f32 %v943, 0.25
      %v1002 = vmul.f32 %v910, 0.25
      %v1003 = vmul.f32 %v944, 0.25
      %v1004 = vmul.f32 %v913, 0.25
      %v1005 = vmul.f32 %v945, 0.25
      %v1006 = vmul.f32 %v916, 0.25
      %v1007 = vmul.f32 %v946, 0.25
      %v1008 = vmul.f32 %v919, 0.25
      %v1009 = vmul.f32 %v947, 0.25
      %v1010 = vmul.f32 %v922, 0.25
      %v1011 = vmul.f32 %v948, 0.25
      %v1012 = vmul.f32 %v925, 0.25
      %v1013 = vmul.f32 %v949, 0.25
      %v1014 = vadd.f32 %v966, %v998
      %v1015 = vadd.f32 %v967, %v999
      %v1016 = vadd.f32 %v968, %v1000
      %v1017 = vadd.f32 %v969, %v1001
      %v1018 = vadd.f32 %v970, %v1002
      %v1019 = vadd.f32 %v971, %v1003
      %v1020 = vadd.f32 %v972, %v1004
      %v1021 = vadd.f32 %v973, %v1005
      %v1022 = vadd.f32 %v974, %v1006
      %v1023 = vadd.f32 %v975, %v1007
      %v1024 = vadd.f32 %v976, %v1008
      %v1025 = vadd.f32 %v977, %v1009
      %v1026 = vadd.f32 %v978, %v1010
      %v1027 = vadd.f32 %v979, %v1011
      %v1028 = vadd.f32 %v980, %v1012
      %v1029 = vadd.f32 %v981, %v1013
      %1046 = vrot.lane.b32.xlu0 %v1014, 8
      %v1047 = vpop.permute.xlu0 %1046
      %1048 = vrot.lane.b32.xlu0 %v1015, 8
      %v1049 = vpop.permute.xlu0 %1048
      %1050 = vrot.lane.b32.xlu0 %v1016, 8
      %v1051 = vpop.permute.xlu0 %1050
      %1052 = vrot.lane.b32.xlu0 %v1017, 8
      %v1053 = vpop.permute.xlu0 %1052
      %1054 = vrot.lane.b32.xlu0 %v1018, 8
      %v1055 = vpop.permute.xlu0 %1054
      %1056 = vrot.lane.b32.xlu0 %v1019, 8
      %v1057 = vpop.permute.xlu0 %1056
      %1058 = vrot.lane.b32.xlu0 %v1020, 8
      %v1059 = vpop.permute.xlu0 %1058
      %1060 = vrot.lane.b32.xlu0 %v1021, 8
      %v1061 = vpop.permute.xlu0 %1060
      %1062 = vrot.lane.b32.xlu0 %v1022, 8
      %v1063 = vpop.permute.xlu0 %1062
      %1064 = vrot.lane.b32.xlu0 %v1023, 8
      %v1065 = vpop.permute.xlu0 %1064
      %1066 = vrot.lane.b32.xlu0 %v1024, 8
      %v1067 = vpop.permute.xlu0 %1066
      %1068 = vrot.lane.b32.xlu0 %v1025, 8
      %v1069 = vpop.permute.xlu0 %1068
      %1070 = vrot.lane.b32.xlu0 %v1026, 8
      %v1071 = vpop.permute.xlu0 %1070
      %1072 = vrot.lane.b32.xlu0 %v1027, 8
      %v1073 = vpop.permute.xlu0 %1072
      %1074 = vrot.lane.b32.xlu0 %v1028, 8
      %v1075 = vpop.permute.xlu0 %1074
      %1076 = vrot.lane.b32.xlu0 %v1029, 8
      %v1077 = vpop.permute.xlu0 %1076
      %v1094 = vsel %vm772, %v982, %v1047
      %v1095 = vsel %vm772, %v983, %v1049
      %v1096 = vsel %vm772, %v984, %v1051
      %v1097 = vsel %vm772, %v985, %v1053
      %v1098 = vsel %vm772, %v986, %v1055
      %v1099 = vsel %vm772, %v987, %v1057
      %v1100 = vsel %vm772, %v988, %v1059
      %v1101 = vsel %vm772, %v989, %v1061
      %v1102 = vsel %vm772, %v990, %v1063
      %v1103 = vsel %vm772, %v991, %v1065
      %v1104 = vsel %vm772, %v992, %v1067
      %v1105 = vsel %vm772, %v993, %v1069
      %v1106 = vsel %vm772, %v994, %v1071
      %v1107 = vsel %vm772, %v995, %v1073
      %v1108 = vsel %vm772, %v996, %v1075
      %v1109 = vsel %vm772, %v997, %v1077
      %s1110 = scalar_lea.vmem %s222, 16
      %v1111 = vld [vmem:[%s1110] sm:$0xff]
      %v1112 = vld [vmem:[%s1110 + $0x8] sm:$0xff]
      %v1113 = vld [vmem:[%s1110 + $0x20] sm:$0xff]
      %v1114 = vld [vmem:[%s1110 + $0x28] sm:$0xff]
      %v1115 = vld [vmem:[%s1110 + $0x40] sm:$0xff]
      %v1116 = vld [vmem:[%s1110 + $0x48] sm:$0xff]
      %v1117 = vld [vmem:[%s1110 + $0x60] sm:$0xff]
      %v1118 = vld [vmem:[%s1110 + $0x68] sm:$0xff]
      %v1119 = vld [vmem:[%s1110 + $0x80] sm:$0xff]
      %v1120 = vld [vmem:[%s1110 + $0x88] sm:$0xff]
      %v1121 = vld [vmem:[%s1110 + $0xa0] sm:$0xff]
      %v1122 = vld [vmem:[%s1110 + $0xa8] sm:$0xff]
      %v1123 = vld [vmem:[%s1110 + $0xc0] sm:$0xff]
      %v1124 = vld [vmem:[%s1110 + $0xc8] sm:$0xff]
      %v1125 = vld [vmem:[%s1110 + $0xe0] sm:$0xff]
      %v1126 = vld [vmem:[%s1110 + $0xe8] sm:$0xff]
      %v1127 = vadd.f32 %v1094, %v1111
      %v1128 = vadd.f32 %v1095, %v1112
      %v1129 = vadd.f32 %v1096, %v1113
      %v1130 = vadd.f32 %v1097, %v1114
      %v1131 = vadd.f32 %v1098, %v1115
      %v1132 = vadd.f32 %v1099, %v1116
      %v1133 = vadd.f32 %v1100, %v1117
      %v1134 = vadd.f32 %v1101, %v1118
      %v1135 = vadd.f32 %v1102, %v1119
      %v1136 = vadd.f32 %v1103, %v1120
      %v1137 = vadd.f32 %v1104, %v1121
      %v1138 = vadd.f32 %v1105, %v1122
      %v1139 = vadd.f32 %v1106, %v1123
      %v1140 = vadd.f32 %v1107, %v1124
      %v1141 = vadd.f32 %v1108, %v1125
      %v1142 = vadd.f32 %v1109, %v1126
      %s1143 = scalar_lea.vmem %s233, 16
      %1144 = vst.msk [vmem:[%s1143] sm:$0xff] %vm821, %v1127
      %1145 = vst.msk [vmem:[%s1143 + $0x8] sm:$0xff] %vm821, %v1128
      %1146 = vst.msk [vmem:[%s1143 + $0x20] sm:$0xff] %vm821, %v1129
      %1147 = vst.msk [vmem:[%s1143 + $0x28] sm:$0xff] %vm821, %v1130
      %1148 = vst.msk [vmem:[%s1143 + $0x40] sm:$0xff] %vm821, %v1131
      %1149 = vst.msk [vmem:[%s1143 + $0x48] sm:$0xff] %vm821, %v1132
      %1150 = vst.msk [vmem:[%s1143 + $0x60] sm:$0xff] %vm821, %v1133
      %1151 = vst.msk [vmem:[%s1143 + $0x68] sm:$0xff] %vm821, %v1134
      %1152 = vst.msk [vmem:[%s1143 + $0x80] sm:$0xff] %vm821, %v1135
      %1153 = vst.msk [vmem:[%s1143 + $0x88] sm:$0xff] %vm821, %v1136
      %1154 = vst.msk [vmem:[%s1143 + $0xa0] sm:$0xff] %vm821, %v1137
      %1155 = vst.msk [vmem:[%s1143 + $0xa8] sm:$0xff] %vm821, %v1138
      %1156 = vst.msk [vmem:[%s1143 + $0xc0] sm:$0xff] %vm821, %v1139
      %1157 = vst.msk [vmem:[%s1143 + $0xc8] sm:$0xff] %vm821, %v1140
      %1158 = vst.msk [vmem:[%s1143 + $0xe0] sm:$0xff] %vm821, %v1141
      %1159 = vst.msk [vmem:[%s1143 + $0xe8] sm:$0xff] %vm821, %v1142
      %s1160 = smul.u32 8, %s19
      %p1161 = scmp.lt.s32.totalorder %s18, 1
      %s1162 = scalar_select %p1161, %s18, 1
      %p1163 = scmp.lt.s32.totalorder %s1160, 15
      %s1164 = scalar_select %p1163, %s1160, 15
      %s1165 = smul.addr %s1164, 4
      %s1166 = smul.addr %s1162, 64
      %s1167 = sadd.s32 %s1165, %s1166
      %s1168 = smul.addr %s1167, 8
      %s1169 = scalar_lea.vmem %s3, %s1168
      // Predicated region
      $region33: #{skip_upsample.1} parent=31 // pred_check
        %p1170 = pneg %p121
      $region34: #{skip_upsample.1} parent=31 // pred_check_branch
        %1172 = sbr.rel (%p1170) target = $region36
      $region35: #{skip_upsample.1} parent=31 // pred_region
        %s1173 = smul.u32 8, %s19
      $region36: #{skip_upsample.1} parent=31 // pred_fallthru
        _
    $region32: #{skip_upsample.1} parent=5 // pred_fallthru
      _
    %p1174 = scmp.le.s32.totalorder 2, %s9
    // Predicated region
    $region37: #{skip_upsample.1} parent=5 // pred_check
      %p1175 = pneg %p1174
    $region38: #{skip_upsample.1} parent=5 // pred_check_branch
      %1177 = sbr.rel (%p1175) target = $region40
    $region39: #{skip_upsample.1} parent=5 // pred_region
      %s1178 = ssub.s32 %s9, 2
      // Predicated region
      $region41: #{skip_upsample.1} parent=39 // pred_check
        %p1179 = pneg %p127
      $region42: #{skip_upsample.1} parent=39 // pred_check_branch
        %1181 = sbr.rel (%p1179) target = $region44
      $region43: #{skip_upsample.1} parent=39 // pred_region
        %s1182 = smul.u32 8, %s21
        %p1183 = scmp.lt.s32.totalorder %s20, 1
        %s1184 = scalar_select %p1183, %s20, 1
        %p1185 = scmp.lt.s32.totalorder %s1182, 15
        %s1186 = scalar_select %p1185, %s1182, 15
        %s1187 = smul.addr %s1186, 4
        %s1188 = smul.addr %s1184, 64
        %s1189 = sadd.s32 %s1187, %s1188
        %s1190 = smul.addr %s1189, 8
        %s1191 = scalar_lea.vmem %s3, %s1190
      $region44: #{skip_upsample.1} parent=39 // pred_fallthru
        _
    $region40: #{skip_upsample.1} parent=5 // pred_fallthru
      _
  $region6: #{skip_upsample.1} parent=0 // loop_footer
    %s13 = sadd.s32 1, %s9
  $region7: #{skip_upsample.1} parent=0 // loop_footer_branch
    %8 = sbr.rel target = $region3
  $region8: #{skip_upsample.1} parent=0 // loop_exit
    _

</llo_original>
